<compile_context>
chip_gen: v7x
topology: tpu7x:2x2x1
jax: 0.10.0
libtpu: 0.0.40
codegen_flags: <defaults>
</compile_context>

<pallas_src>
import math

import jax
import jax.numpy as jnp
from jax.experimental import pallas as pl
from jax.experimental.pallas import tpu as pltpu


def _build_pe(d_model: int, max_len: int = 5000, dtype=jnp.float32) -> jnp.ndarray:
    """Sinusoidal positional-encoding table, shape [max_len, 1, d_model]."""
    position = jnp.arange(max_len, dtype=jnp.float32)[:, None]              # [max_len, 1]
    div_term = jnp.exp(
        jnp.arange(0, d_model, 2, dtype=jnp.float32) * (-math.log(10000.0) / d_model)
    )                                                                        # [d_model//2]
    angles = position * div_term                                             # [max_len, d_model//2]
    pe = jnp.zeros((max_len, d_model), dtype=jnp.float32)
    pe = pe.at[:, 0::2].set(jnp.sin(angles))
    pe = pe.at[:, 1::2].set(jnp.cos(angles))
    return pe[:, None, :].astype(dtype)                                      # [max_len, 1, d_model]


def _pe_add_kernel(x_ref, pe_ref, o_ref):
    # x_ref: (ts, B, D) VMEM tile; pe_ref: (ts, 1, D) — broadcasts over the batch axis.
    o_ref[...] = x_ref[...] + pe_ref[...]


def _choose_seq_tile(S: int, B: int, D: int, itemsize: int,
                     target_block_bytes: int = 2 << 20) -> int:
    """Seq tile such that each x/out block is ~2 MiB, with >= 2 grid steps when possible."""
    bytes_per_row = max(1, B * D * itemsize)
    ts = max(1, target_block_bytes // bytes_per_row)
    if ts >= 8:
        ts = (ts // 8) * 8                      # keep seq-block offsets 8-aligned
    ts = min(ts, max(1, pl.cdiv(S, 2)))         # >= 2 grid steps (v7x dual-TC, pipelining)
    return int(min(ts, S))


def positional_encoding(x: jnp.ndarray, pe: jnp.ndarray, *,
                        seq_tile: int | None = None,
                        donate_x: bool = False) -> jnp.ndarray:
    """x: [S, B, D]; pe: [max_len, 1, D] -> x + pe[:S] (dropout == identity)."""
    S, B, D = x.shape
    max_len = pe.shape[0]
    assert S <= max_len, "sequence length exceeds positional-encoding table"
    assert pe.shape[2] == D, "d_model mismatch between x and pe"

    # Do the add in the activation dtype (bf16 stays bf16; no silent f32 round-trip).
    pe = pe.astype(x.dtype)

    ts = _choose_seq_tile(S, B, D, x.dtype.itemsize) if seq_tile is None else int(seq_tile)
    grid = (pl.cdiv(S, ts),)    # ragged S -> Pallas masks the partial last block

    return pl.pallas_call(
        _pe_add_kernel,
        out_shape=jax.ShapeDtypeStruct((S, B, D), x.dtype),
        grid_spec=pltpu.PrefetchScalarGridSpec(
            num_scalar_prefetch=0,
            grid=grid,
            in_specs=[
                pl.BlockSpec((ts, B, D), lambda i: (i, 0, 0)),
                # pe indexed directly (no wrapper-side pe[:S] copy of the table):
                # block i only touches rows [i*ts, i*ts + ts), inside the table for S <= max_len.
                pl.BlockSpec((ts, 1, D), lambda i: (i, 0, 0)),
            ],
            out_specs=pl.BlockSpec((ts, B, D), lambda i: (i, 0, 0)),
        ),
        compiler_params=pltpu.CompilerParams(dimension_semantics=("parallel",)),
        # Optionally overwrite x in place (removes the extra output allocation when
        # the caller donates x / does not reuse it).
        input_output_aliases=({0: 0} if donate_x else {}),
    )(x, pe)


if __name__ == "__main__":
    seq_len, batch, d_model = 8, 2, 32
    max_len = 64  # small deterministic table (same construction as max_len=5000)

    key = jax.random.PRNGKey(0)
    x = jax.random.normal(key, (seq_len, batch, d_model), dtype=jnp.float32)
    pe = _build_pe(d_model, max_len)

    # f32 path
    out = jax.block_until_ready(positional_encoding(x, pe))
    ref = x + pe[:seq_len]
    assert out.shape == (seq_len, batch, d_model)
    assert jnp.allclose(out, ref, atol=1e-6), "f32 mismatch vs reference"

    # bf16 path (add stays in bf16; pe is cast inside the wrapper)
    x_bf16 = x.astype(jnp.bfloat16)
    out_bf16 = jax.block_until_ready(positional_encoding(x_bf16, pe))
    ref_bf16 = x_bf16 + pe[:seq_len].astype(jnp.bfloat16)
    assert out_bf16.dtype == jnp.bfloat16
    assert jnp.allclose(out_bf16.astype(jnp.float32),
                        ref_bf16.astype(jnp.float32), atol=1e-2), "bf16 mismatch vs reference"

    # ragged sequence length (partial last seq tile -> masked writeback)
    x_odd = jax.random.normal(jax.random.PRNGKey(1), (7, batch, d_model), dtype=jnp.float32)
    out_odd = jax.block_until_ready(positional_encoding(x_odd, pe))
    assert jnp.allclose(out_odd, x_odd + pe[:7], atol=1e-6), "ragged-S mismatch vs reference"

    print("KERNEL_OK")
</pallas_src>

<mosaic_0001>
module attributes {stable_mosaic.version = 11 : i64} {
  func.func @_pe_add_kernel(%arg0: i32, %arg1: memref<4x2x32xf32, #tpu.memory_space<vmem>>, %arg2: memref<4x1x32xf32, #tpu.memory_space<vmem>>, %arg3: memref<4x2x32xf32, #tpu.memory_space<vmem>>) attributes {dimension_semantics = [#tpu.dimension_semantics<parallel>], iteration_bounds = array<i64: 2>, scalar_prefetch = 0 : i64, scratch_operands = 0 : i64, tpu.core_type = #tpu.core_type<tc>, window_params = [{transform_indices = @transform_0, window_bounds = array<i64: 4, 2, 32>}, {transform_indices = @transform_1, window_bounds = array<i64: 4, 1, 32>}, {transform_indices = @transform_2, window_bounds = array<i64: 4, 2, 32>}]} {
    %c0 = arith.constant 0 : index
    %c0_0 = arith.constant 0 : index
    %c0_1 = arith.constant 0 : index
    %0 = vector.load %arg1[%c0, %c0_0, %c0_1] : memref<4x2x32xf32, #tpu.memory_space<vmem>>, vector<4x2x32xf32>
    %c0_2 = arith.constant 0 : index
    %c0_3 = arith.constant 0 : index
    %c0_4 = arith.constant 0 : index
    %1 = vector.load %arg2[%c0_2, %c0_3, %c0_4] : memref<4x1x32xf32, #tpu.memory_space<vmem>>, vector<4x1x32xf32>
    %2 = vector.broadcast %1 : vector<4x1x32xf32> to vector<4x2x32xf32>
    %3 = arith.addf %0, %2 : vector<4x2x32xf32>
    %c0_5 = arith.constant 0 : index
    %c0_6 = arith.constant 0 : index
    %c0_7 = arith.constant 0 : index
    %4 = vector.load %arg3[%c0_5, %c0_6, %c0_7] : memref<4x2x32xf32, #tpu.memory_space<vmem>>, vector<4x2x32xf32>
    tpu.vector_store %arg3[%c0_5, %c0_6, %c0_7], %3 {strides = array<i32>} : memref<4x2x32xf32, #tpu.memory_space<vmem>>, vector<4x2x32xf32>,
    return
  }
  func.func @transform_0(%arg0: i32) -> (i32, i32, i32) {
    %c0_i32 = arith.constant 0 : i32
    %c0_i32_0 = arith.constant 0 : i32
    %c0_i32_1 = arith.constant 0 : i32
    return %arg0, %c0_i32, %c0_i32_0 : i32, i32, i32
  }
  func.func @transform_1(%arg0: i32) -> (i32, i32, i32) {
    %c0_i32 = arith.constant 0 : i32
    %c0_i32_0 = arith.constant 0 : i32
    %c0_i32_1 = arith.constant 0 : i32
    return %arg0, %c0_i32, %c0_i32_0 : i32, i32, i32
  }
  func.func @transform_2(%arg0: i32) -> (i32, i32, i32) {
    %c0_i32 = arith.constant 0 : i32
    %c0_i32_0 = arith.constant 0 : i32
    %c0_i32_1 = arith.constant 0 : i32
    return %arg0, %c0_i32, %c0_i32_0 : i32, i32, i32
  }
}

</mosaic_0001>

<llo_original>
// kernel: tpu_custom_call.1
$region0: #{tpu_custom_call.1}
  #allocation0 [shape = 'u32[]', space=smem, size = 0x4, offset = 0x4, fixed_abs, tag = 'smem constant byte address 0x4 - core index']
  #allocation1 [shape = 'u32[144,128]{1,0:T(1,128)}', space=vmem, size = 0x12000, scoped, tag = 'internal scratch']
  %s0 = inlined_call_operand.vmem [shape: f32[8,2,32], index: 0, kind: input, shape index: {}]
  %s1 = inlined_call_operand.vmem [shape: f32[64,1,32], index: 1, kind: input, shape index: {}]
  %s2 = inlined_call_operand.hbm [shape: f32[8,2,32], index: 2, kind: output, shape index: {}]
  %s3 = sld [smem:[#allocation0]]
  $region41: #{tpu_custom_call.1} parent=0
    _
  %s5 = ssub.s32 1, %s3
  %s6 = scalar_select 0, %s5, %s3
  $region1: #{tpu_custom_call.1} parent=0
    #allocation2 [shape = 'u8[8192]{0}', space=vmem, size = 0x2000, scoped, tag = 'output window, operand 0']
    #allocation3 [shape = 's32[2]{0}', space=sflag, size = 0x8, scoped, tag = 'scoped memory for tpu_custom_call.1']
    %7 = vsyncpa [#allocation3], 0
    %s8 = scalar_lea.sflag [#allocation3], 1
    %9 = vsyncpa %s8, 0
    loop: start=0, step=1, limit=4
    $region2: #{tpu_custom_call.1} parent=1 // loop_pre_header
      _
    $region3: #{tpu_custom_call.1} parent=1 // loop_header
      %s11 = sphi 0, %s15
      %p12 = scmp.ge.s32.totalorder %s11, 4
      %s21 = sphi 0, %s23
      %s24 = sphi 0, %s21
      %s25 = sphi 0, %s24
      %s41 = sphi 0, %s25
      %s47 = sphi 0, %s49
      %s50 = sphi 0, %s47
      %s51 = sphi 0, %s50
      %s67 = sphi 0, %s51
      %s73 = sphi 0, %s75
      %s76 = sphi 0, %s73
      %s77 = sphi 0, %s76
      %s93 = sphi 0, %s77
    $region4: #{tpu_custom_call.1} parent=1 // loop_header_branch
      %14 = sbr.rel (%p12) target = $region8
    $region5: #{tpu_custom_call.1} parent=1 // loop_body
      %s16 = ssub.s32 %s11, 1
      %s17 = ssub.s32 %s11, 2
      %s18 = sadd.s32 %s11, 1
      %s19 = ssub.s32 %s11, %s18
      %p20 = scmp.eq.s32.totalorder %s19, 0
      %s22 = sadd.s32 %s21, 1
      %s23 = scalar_select %p20, %s21, %s22
      %p26 = pneg %p20
      %p27 = scmp.eq.s32.totalorder %s11, 1
      %p28 = por %p26, %p27
      %p29 = scmp.ne.s32.totalorder %s21, %s24
      %p30 = scmp.eq.s32.totalorder %s11, 0
      %p31 = por %p29, %p30
      %p32 = scmp.ne.s32.totalorder %s21, %s24
      %p33 = scmp.eq.s32.totalorder %s16, 1
      %p34 = por %p32, %p33
      %p35 = scmp.ne.s32.totalorder %s24, %s25
      %p36 = scmp.eq.s32.totalorder %s16, 0
      %p37 = por %p35, %p36
      %p38 = scmp.ne.s32.totalorder %s24, %s25
      %p39 = scmp.eq.s32.totalorder %s17, 1
      %p40 = por %p38, %p39
      %p42 = scmp.ne.s32.totalorder %s25, %s41
      %p43 = scmp.eq.s32.totalorder %s17, 0
      %p44 = por %p42, %p43
      %s45 = ssub.s32 %s11, %s18
      %p46 = scmp.eq.s32.totalorder %s45, 0
      %s48 = sadd.s32 %s47, 1
      %s49 = scalar_select %p46, %s47, %s48
      %p52 = pneg %p46
      %p53 = scmp.eq.s32.totalorder %s11, 1
      %p54 = por %p52, %p53
      %p55 = scmp.ne.s32.totalorder %s47, %s50
      %p56 = scmp.eq.s32.totalorder %s11, 0
      %p57 = por %p55, %p56
      %p58 = scmp.ne.s32.totalorder %s47, %s50
      %p59 = scmp.eq.s32.totalorder %s16, 1
      %p60 = por %p58, %p59
      %p61 = scmp.ne.s32.totalorder %s50, %s51
      %p62 = scmp.eq.s32.totalorder %s16, 0
      %p63 = por %p61, %p62
      %p64 = scmp.ne.s32.totalorder %s50, %s51
      %p65 = scmp.eq.s32.totalorder %s17, 1
      %p66 = por %p64, %p65
      %p68 = scmp.ne.s32.totalorder %s51, %s67
      %p69 = scmp.eq.s32.totalorder %s17, 0
      %p70 = por %p68, %p69
      %s71 = ssub.s32 %s11, %s18
      %p72 = scmp.eq.s32.totalorder %s71, 0
      %s74 = sadd.s32 %s73, 1
      %s75 = scalar_select %p72, %s73, %s74
      %p78 = pneg %p72
      %p79 = scmp.eq.s32.totalorder %s11, 1
      %p80 = por %p78, %p79
      %p81 = scmp.ne.s32.totalorder %s73, %s76
      %p82 = scmp.eq.s32.totalorder %s11, 0
      %p83 = por %p81, %p82
      %p84 = scmp.ne.s32.totalorder %s73, %s76
      %p85 = scmp.eq.s32.totalorder %s16, 1
      %p86 = por %p84, %p85
      %p87 = scmp.ne.s32.totalorder %s76, %s77
      %p88 = scmp.eq.s32.totalorder %s16, 0
      %p89 = por %p87, %p88
      %p90 = scmp.ne.s32.totalorder %s76, %s77
      %p91 = scmp.eq.s32.totalorder %s17, 1
      %p92 = por %p90, %p91
      %p94 = scmp.ne.s32.totalorder %s77, %s93
      %p95 = scmp.eq.s32.totalorder %s17, 0
      %p96 = por %p94, %p95
      %p97 = scmp.le.s32.totalorder 1, %s11
      %p98 = scmp.lt.s32.totalorder %s11, 3
      %p99 = pnand %p97, %p98
      %p100 = pneg %p99
      // Predicated region
      $region9: #{tpu_custom_call.1} parent=5 // pred_check
        _
      $region10: #{tpu_custom_call.1} parent=5 // pred_check_branch
        %102 = sbr.rel (%p99) target = $region12
      $region11: #{tpu_custom_call.1} parent=5 // pred_region
        %s103 = ssub.s32 %s11, 1
      $region12: #{tpu_custom_call.1} parent=5 // pred_fallthru
        _
      %p104 = scmp.lt.s32.totalorder %s11, 2
      // Predicated region
      $region13: #{tpu_custom_call.1} parent=5 // pred_check
        %p105 = pneg %p104
      $region14: #{tpu_custom_call.1} parent=5 // pred_check_branch
        %107 = sbr.rel (%p105) target = $region16
      $region15: #{tpu_custom_call.1} parent=5 // pred_region
        // Predicated region
        $region17: #{tpu_custom_call.1} parent=15 // pred_check
          %p108 = pneg %p31
        $region18: #{tpu_custom_call.1} parent=15 // pred_check_branch
          %110 = sbr.rel (%p108) target = $region20
        $region19: #{tpu_custom_call.1} parent=15 // pred_region
          %s111 = smul.u32 4, %s11
          %p112 = scmp.lt.s32.totalorder %s111, 7
          %s113 = scalar_select %p112, %s111, 7
          %s114 = smul.addr %s113, 2
          %s115 = scalar_lea.vmem %s0, %s114
          %s116 = smul.u32 4, %s11
        $region20: #{tpu_custom_call.1} parent=15 // pred_fallthru
          _
        // Predicated region
        $region21: #{tpu_custom_call.1} parent=15 // pred_check
          %p117 = pneg %p57
        $region22: #{tpu_custom_call.1} parent=15 // pred_check_branch
          %119 = sbr.rel (%p117) target = $region24
        $region23: #{tpu_custom_call.1} parent=15 // pred_region
          %s120 = smul.u32 4, %s11
          %p121 = scmp.lt.s32.totalorder %s120, 63
          %s122 = scalar_select %p121, %s120, 63
          %s123 = scalar_lea.vmem %s1, %s122
          %s124 = smul.u32 4, %s11
        $region24: #{tpu_custom_call.1} parent=15 // pred_fallthru
          _
      $region16: #{tpu_custom_call.1} parent=5 // pred_fallthru
        _
      %p125 = scmp.le.s32.totalorder 1, %s11
      %p126 = scmp.lt.s32.totalorder %s11, 3
      %p127 = pnand %p125, %p126
      %p128 = pneg %p127
      // Predicated region
      $region25: #{tpu_custom_call.1} parent=5 // pred_check
        _
      $region26: #{tpu_custom_call.1} parent=5 // pred_check_branch
        %130 = sbr.rel (%p127) target = $region28
      $region27: #{tpu_custom_call.1} parent=5 // pred_region
        %s131 = ssub.s32 %s11, 1
        %s132 = smul.u32 4, %s16
        %p133 = scmp.lt.s32.totalorder %s132, 7
        %s134 = scalar_select %p133, %s132, 7
        %s135 = smul.addr %s134, 2
        %s136 = scalar_lea.vmem %s0, %s135
        %p137 = pneg %p37
        %p138 = pneg %p34
        %s139 = smul.u32 4, %s16
        %p140 = scmp.lt.s32.totalorder %s139, 63
        %s141 = scalar_select %p140, %s139, 63
        %s142 = scalar_lea.vmem %s1, %s141
        %p143 = pneg %p63
        %p144 = pneg %p60
        %p145 = pneg %p89
        %p146 = pneg %p86
        %s147 = sand.u32 %s76, 1
        %s148 = scalar_lea.sflag [#allocation3], %s147
        %s149 = sand.u32 %s76, 1
        %s150 = smul.addr %s149, 8
        %s151 = scalar_lea.vmem [#allocation2], %s150
        %s152 = smul.u32 4, %s16
        %p153 = scmp.lt.s32.totalorder %s152, 7
        %s154 = scalar_select %p153, %s152, 7
        %s155 = smul.addr %s154, 2
        %s156 = scalar_lea.vmem %s0, %s155
        %s157 = smul.u32 4, %s16
        %s158 = smul.u32 4, %s16
        %p159 = scmp.lt.s32.totalorder %s158, 63
        %s160 = scalar_select %p159, %s158, 63
        %s161 = scalar_lea.vmem %s1, %s160
        %s162 = smul.u32 4, %s16
        %s163 = smul.u32 4, %s16
        %v164 = vld [vmem:[%s156] sm:$0x3]
        %v165 = vld [vmem:[%s156 + $0x2] sm:$0x3]
        %v166 = vld [vmem:[%s156 + $0x4] sm:$0x3]
        %v167 = vld [vmem:[%s156 + $0x6] sm:$0x3]
        %v168 = vld [vmem:[%s161] sm:$0x1]
        %v169 = vld [vmem:[%s161 + $0x1] sm:$0x1]
        %v170 = vld [vmem:[%s161 + $0x2] sm:$0x1]
        %v171 = vld [vmem:[%s161 + $0x3] sm:$0x1]
        %v176 = vlaneseq
        %v177 = vshrl.u32 %v176, 7
        %v178 = vsub.s32 0, %v177
        %v179 = vrot.slane %v168, %v178
        %v180 = vlaneseq
        %v181 = vshrl.u32 %v180, 7
        %v182 = vsub.s32 0, %v181
        %v183 = vrot.slane %v169, %v182
        %v184 = vlaneseq
        %v185 = vshrl.u32 %v184, 7
        %v186 = vsub.s32 0, %v185
        %v187 = vrot.slane %v170, %v186
        %v188 = vlaneseq
        %v189 = vshrl.u32 %v188, 7
        %v190 = vsub.s32 0, %v189
        %v191 = vrot.slane %v171, %v190
        %v196 = vadd.f32 %v164, %v179
        %v197 = vadd.f32 %v165, %v183
        %v198 = vadd.f32 %v166, %v187
        %v199 = vadd.f32 %v167, %v191
        %vm200 = vcmask 254976
        %201 = vst.msk [vmem:[%s151] sm:$0x3] %vm200, %v196
        %202 = vst.msk [vmem:[%s151 + $0x2] sm:$0x3] %vm200, %v197
        %203 = vst.msk [vmem:[%s151 + $0x4] sm:$0x3] %vm200, %v198
        %204 = vst.msk [vmem:[%s151 + $0x6] sm:$0x3] %vm200, %v199
        %s205 = sand.u32 %s76, 1
        %s206 = scalar_lea.sflag [#allocation3], %s205
        %s207 = sand.u32 %s76, 1
        %s208 = smul.addr %s207, 8
        %s209 = scalar_lea.vmem [#allocation2], %s208
        // Predicated region
        $region29: #{tpu_custom_call.1} parent=27 // pred_check
          %p210 = pneg %p86
        $region30: #{tpu_custom_call.1} parent=27 // pred_check_branch
          %212 = sbr.rel (%p210) target = $region32
        $region31: #{tpu_custom_call.1} parent=27 // pred_region
          %s213 = smul.u32 4, %s16
          %s215 = ssub.s32 128, 128
          %216 = vsyncadd %s206, %s215
          %s217 = smul.addr %s213, 32
          %s218 = scalar_lea.hbm %s2, %s217
          %s219 = sshll.u32 %s209, 4
          %s220 = int_to_ptr.vmem [resolvable:$true] %s219
          %225 = dma.vmem_to_hbm [thread:$0]  %s220, 128, %s218, %s206, 32, 32, 2
        $region32: #{tpu_custom_call.1} parent=27 // pred_fallthru
          _
      $region28: #{tpu_custom_call.1} parent=5 // pred_fallthru
        _
      %p226 = scmp.le.s32.totalorder 2, %s11
      // Predicated region
      $region33: #{tpu_custom_call.1} parent=5 // pred_check
        %p227 = pneg %p226
      $region34: #{tpu_custom_call.1} parent=5 // pred_check_branch
        %229 = sbr.rel (%p227) target = $region36
      $region35: #{tpu_custom_call.1} parent=5 // pred_region
        %s230 = ssub.s32 %s11, 2
        // Predicated region
        $region37: #{tpu_custom_call.1} parent=35 // pred_check
          %p231 = pneg %p92
        $region38: #{tpu_custom_call.1} parent=35 // pred_check_branch
          %233 = sbr.rel (%p231) target = $region40
        $region39: #{tpu_custom_call.1} parent=35 // pred_region
          %s234 = sand.u32 %s77, 1
          %s235 = scalar_lea.sflag [#allocation3], %s234
          %s236 = sand.u32 %s77, 1
          %s237 = smul.addr %s236, 8
          %s238 = scalar_lea.vmem [#allocation2], %s237
          %239 = dma.done %s235, 128
        $region40: #{tpu_custom_call.1} parent=35 // pred_fallthru
          _
      $region36: #{tpu_custom_call.1} parent=5 // pred_fallthru
        _
    $region6: #{tpu_custom_call.1} parent=1 // loop_footer
      %s15 = sadd.s32 1, %s11
    $region7: #{tpu_custom_call.1} parent=1 // loop_footer_branch
      %10 = sbr.rel target = $region3
    $region8: #{tpu_custom_call.1} parent=1 // loop_exit
      _
    %240 = vsyncpa [#allocation3], 1
    %s241 = scalar_lea.sflag [#allocation3], 1
    %242 = vsyncpa %s241, 1

</llo_original>
